<compile_context>
chip_gen: v6e
topology: v6e:2x2x1
jax: 0.10.0
libtpu: 0.0.40
codegen_flags: <defaults>
</compile_context>

<pallas_src>
import functools

import jax
import jax.numpy as jnp
from jax.experimental import pallas as pl
from jax.experimental.pallas import tpu as pltpu

BN_EPS = 1e-5
_VMEM_LIMIT = 48 * 1024 * 1024    # safe on v7x (64 MiB physical), above default on v5e/v6e
_VMEM_BUDGET = 40 * 1024 * 1024   # target per-pass working set (headroom under the limit)


def _round_up(x, m):
    return (x + m - 1) // m * m


# -------- Pass 1: stats-only (tile matmul + per-tile per-channel sum / sumsq) ---------
def conv_stats_kernel(patch_ref, w_ref, sum_ref, sumsq_ref):
    # patch_ref: [TILE_M, K_pad] bf16 (streamed)
    # w_ref:     [K_pad, Cout_pad] bf16 (resident)
    # sum_ref / sumsq_ref: [1, 1, Cout_pad] f32 per-tile partials (one row per grid step)
    conv = jnp.dot(patch_ref[...], w_ref[...], preferred_element_type=jnp.float32)
    s = jnp.sum(conv, axis=0, keepdims=True)
    sq = jnp.sum(conv * conv, axis=0, keepdims=True)
    sum_ref[...] = s[None]
    sumsq_ref[...] = sq[None]


# -------- Pass 2: recompute matmul, fuse BN scale/shift + LeakyReLU, stream out -------
def conv_bn_lrelu_kernel(patch_ref, w_ref, ss_ref, out_ref, *, alpha):
    # patch_ref: [TILE_M, K_pad] bf16, w_ref: [K_pad, Cout_pad] bf16 (resident)
    # ss_ref: [2, Cout_pad] f32 (row 0 = scale, row 1 = shift)
    conv = jnp.dot(patch_ref[...], w_ref[...], preferred_element_type=jnp.float32)
    y = conv * ss_ref[0:1, :] + ss_ref[1:2, :]
    out_ref[...] = jnp.where(y >= 0, y, alpha * y).astype(out_ref.dtype)


def discriminator_block(x, weight, bias, gamma, beta, *, stride, padding,
                        alpha=0.2, tile_m=1024, out_dtype=jnp.bfloat16):
    """x: [N, Cin, H, W] (NCHW), weight: [Cout, Cin, KH, KW] (OIHW). Returns NCHW.

    `bias` is accepted for API parity but mathematically cancels under
    training-mode BatchNorm (mean subtraction), so it is not applied.
    Output dtype defaults to bf16 (the matmul operands are bf16 anyway);
    pass out_dtype=jnp.float32 for an f32 output.
    """
    del bias  # exactly cancelled by training-mode BN mean subtraction
    N, Cin, H, W = x.shape
    Cout, _, KH, KW = weight.shape
    OH = (H + 2 * padding - KH) // stride + 1
    OW = (W + 2 * padding - KW) // stride + 1

    # ---- im2col glue in bf16, built directly in (kh, kw, cin) K-order, no big transpose
    x_nhwc = jnp.transpose(x.astype(jnp.bfloat16), (0, 2, 3, 1))       # small tensor only
    xp = jnp.pad(x_nhwc, ((0, 0), (padding, padding), (padding, padding), (0, 0)))
    cols = []
    for i in range(KH):
        for j in range(KW):
            cols.append(xp[:, i:i + stride * OH:stride, j:j + stride * OW:stride, :])
    patches = jnp.concatenate(cols, axis=-1).reshape(N * OH * OW, KH * KW * Cin)

    M, K = patches.shape
    K_pad = _round_up(K, 128)        # lane-dense contraction dim
    Cout_pad = _round_up(Cout, 128)  # lane-dense output/channel dim
    out_itemsize = jnp.dtype(out_dtype).itemsize

    # ---- tile_m: multiple of 8, no larger than needed, fits the VMEM budget (v7x 64 MiB)
    tile_m = max(8, min(_round_up(tile_m, 8), _round_up(M, 8)))

    def _vmem_need(tm):
        return (2 * K_pad * Cout_pad * 2                       # resident weights (slack x2)
                + 2 * tm * K_pad * 2                           # double-buffered patch tiles
                + 2 * tm * Cout_pad * max(out_itemsize, 2)     # double-buffered out tiles
                + 4 * Cout_pad * 4)                            # stats / scale-shift
    while tile_m > 8 and _vmem_need(tile_m) > _VMEM_BUDGET:
        tile_m = max(8, _round_up(tile_m // 2, 8))
    # TODO(synk): for very large Cin (K_pad >~ 2048) add an inner "arbitrary" K grid axis
    # with an f32 VMEM scratch accumulator instead of keeping all of K resident.

    M_pad = _round_up(M, tile_m)
    n_tiles = M_pad // tile_m

    # Zero-padded bf16 operands (padding contributes 0 to matmul and BN sums).
    patches_p = jnp.pad(patches, ((0, M_pad - M), (0, K_pad - K)))            # bf16
    w2 = weight.astype(jnp.bfloat16).transpose(2, 3, 1, 0).reshape(K, Cout)   # (kh,kw,cin)
    w_p = jnp.pad(w2, ((0, K_pad - K), (0, Cout_pad - Cout)))                 # bf16

    # ---------------- Pass 1: per-tile per-channel sum / sum-of-squares ----------------
    sum_p, sumsq_p = pl.pallas_call(
        conv_stats_kernel,
        out_shape=(jax.ShapeDtypeStruct((n_tiles, 1, Cout_pad), jnp.float32),
                   jax.ShapeDtypeStruct((n_tiles, 1, Cout_pad), jnp.float32)),
        grid=(n_tiles,),
        in_specs=[pl.BlockSpec((tile_m, K_pad), lambda i: (i, 0)),
                  pl.BlockSpec((K_pad, Cout_pad), lambda i: (0, 0))],
        out_specs=(pl.BlockSpec((1, 1, Cout_pad), lambda i: (i, 0, 0)),
                   pl.BlockSpec((1, 1, Cout_pad), lambda i: (i, 0, 0))),
        compiler_params=pltpu.CompilerParams(
            dimension_semantics=("parallel",),       # no cross-tile state -> both TCs
            vmem_limit_bytes=_VMEM_LIMIT),
        cost_estimate=pl.CostEstimate(
            flops=2 * M_pad * K_pad * Cout_pad,
            transcendentals=0,
            bytes_accessed=(M_pad * K_pad * 2 + K_pad * Cout_pad * 2
                            + 2 * n_tiles * Cout_pad * 4)),
    )(patches_p, w_p)

    # -------- Finalize BN stats -> fused per-channel scale/shift (tiny, plain JAX) -----
    # Padded rows/channels are all-zero => contribute 0 to sums; divide by the true M.
    ch_sum = jnp.sum(sum_p[:, 0, :], axis=0)
    ch_sumsq = jnp.sum(sumsq_p[:, 0, :], axis=0)
    mean = ch_sum / M
    var = jnp.maximum(ch_sumsq / M - mean * mean, 0.0)   # biased (training-mode) variance
    inv_std = jax.lax.rsqrt(var + BN_EPS)
    gamma_p = jnp.pad(gamma.astype(jnp.float32), (0, Cout_pad - Cout))
    beta_p = jnp.pad(beta.astype(jnp.float32), (0, Cout_pad - Cout))
    scale = gamma_p * inv_std
    shift = beta_p - mean * scale
    scale_shift = jnp.stack([scale, shift], axis=0)      # [2, Cout_pad] f32

    # ----- Pass 2: recompute conv tile, y = conv*scale + shift, LeakyReLU, stream out --
    out_pad = pl.pallas_call(
        functools.partial(conv_bn_lrelu_kernel, alpha=alpha),
        out_shape=jax.ShapeDtypeStruct((M_pad, Cout_pad), out_dtype),
        grid=(n_tiles,),
        in_specs=[pl.BlockSpec((tile_m, K_pad), lambda i: (i, 0)),
                  pl.BlockSpec((K_pad, Cout_pad), lambda i: (0, 0)),
                  pl.BlockSpec((2, Cout_pad), lambda i: (0, 0))],
        out_specs=pl.BlockSpec((tile_m, Cout_pad), lambda i: (i, 0)),
        compiler_params=pltpu.CompilerParams(
            dimension_semantics=("parallel",),       # shard across TCs on v7x
            vmem_limit_bytes=_VMEM_LIMIT),
        cost_estimate=pl.CostEstimate(
            flops=2 * M_pad * K_pad * Cout_pad,
            transcendentals=0,
            bytes_accessed=(M_pad * K_pad * 2 + K_pad * Cout_pad * 2
                            + 2 * Cout_pad * 4 + M_pad * Cout_pad * out_itemsize)),
    )(patches_p, w_p, scale_shift)

    # TODO(synk): return [N, OH, OW, Cout] (NHWC, bf16) directly when downstream allows;
    # NCHW is kept to match PyTorch semantics (relayout is on bf16 data -> half the bytes).
    return out_pad[:M, :Cout].reshape(N, OH, OW, Cout).transpose(0, 3, 1, 2)


# ---------------------------- float32 reference (module semantics) --------------------
def reference(x, weight, bias, gamma, beta, *, stride, padding, alpha=0.2):
    conv = jax.lax.conv_general_dilated(
        x, weight, (stride, stride), [(padding, padding)] * 2,
        dimension_numbers=("NCHW", "OIHW", "NCHW"))
    conv = conv + bias[None, :, None, None]
    mean = conv.mean(axis=(0, 2, 3), keepdims=True)
    var = ((conv - mean) ** 2).mean(axis=(0, 2, 3), keepdims=True)
    y = (conv - mean) * jax.lax.rsqrt(var + BN_EPS)
    y = y * gamma[None, :, None, None] + beta[None, :, None, None]
    return jnp.where(y >= 0, y, alpha * y)


if __name__ == "__main__":
    # DiscriminatorBlock(in_channels=4, out_channels=8, kernel_size=3, stride=2, padding=1)
    N, Cin, H, W = 2, 4, 16, 16
    Cout, KH, KW = 8, 3, 3
    stride, padding, alpha = 2, 1, 0.2

    key = jax.random.PRNGKey(0)
    kx, kw, kb, kg, kbt = jax.random.split(key, 5)
    x = jax.random.normal(kx, (N, Cin, H, W), dtype=jnp.float32)
    weight = jax.random.normal(kw, (Cout, Cin, KH, KW), dtype=jnp.float32) * 0.1
    bias = jax.random.normal(kb, (Cout,), dtype=jnp.float32) * 0.1
    gamma = 1.0 + 0.1 * jax.random.normal(kg, (Cout,), dtype=jnp.float32)
    beta = 0.1 * jax.random.normal(kbt, (Cout,), dtype=jnp.float32)

    # tile_m=64 so the test exercises a real grid (M = 2*8*8 = 128 -> 2 tiles/pass).
    out = discriminator_block(x, weight, bias, gamma, beta,
                              stride=stride, padding=padding, alpha=alpha, tile_m=64)
    out = jax.block_until_ready(out)

    ref = jax.block_until_ready(
        reference(x, weight, bias, gamma, beta, stride=stride, padding=padding, alpha=alpha))
    assert out.shape == ref.shape, (out.shape, ref.shape)
    # bf16 MXU operands + bf16 output (f32 accumulation / f32 BN stats) -> bf16 tolerance.
    out_f32 = out.astype(jnp.float32)
    assert jnp.allclose(out_f32, ref, atol=3e-2, rtol=3e-2), \
        float(jnp.max(jnp.abs(out_f32 - ref)))

    print("KERNEL_OK")
</pallas_src>

<mosaic_0001>
module attributes {stable_mosaic.version = 11 : i64} {
  func.func @conv_stats_kernel(%arg0: i32, %arg1: memref<64x128xbf16, #tpu.memory_space<vmem>>, %arg2: memref<128x128xbf16, #tpu.memory_space<vmem>>, %arg3: memref<1x1x128xf32, #tpu.memory_space<vmem>>, %arg4: memref<1x1x128xf32, #tpu.memory_space<vmem>>) attributes {dimension_semantics = [#tpu.dimension_semantics<parallel>], iteration_bounds = array<i64: 2>, scalar_prefetch = 0 : i64, scratch_operands = 0 : i64, tpu.core_type = #tpu.core_type<tc>, window_params = [{transform_indices = @transform_0, window_bounds = array<i64: 64, 128>}, {pipeline_mode = #tpu.pipeline_mode<synchronous>, transform_indices = @transform_1, window_bounds = array<i64: 128, 128>}, {transform_indices = @transform_2, window_bounds = array<i64: 1, 1, 128>}, {transform_indices = @transform_3, window_bounds = array<i64: 1, 1, 128>}]} {
    %c0 = arith.constant 0 : index
    %c0_0 = arith.constant 0 : index
    %0 = vector.load %arg1[%c0, %c0_0] : memref<64x128xbf16, #tpu.memory_space<vmem>>, vector<64x128xbf16>
    %c0_1 = arith.constant 0 : index
    %c0_2 = arith.constant 0 : index
    %1 = vector.load %arg2[%c0_1, %c0_2] : memref<128x128xbf16, #tpu.memory_space<vmem>>, vector<128x128xbf16>
    %cst = arith.constant dense<0.000000e+00> : vector<64x128xf32>
    %2 = tpu.matmul %0, %1, %cst {dimension_numbers = #tpu.dot_dimension_numbers<[1], [0], [0], [1], [0, 0, 1, 1], [], []>} : vector<64x128xbf16>, vector<128x128xbf16>, vector<64x128xf32> -> vector<64x128xf32>
    %cst_3 = arith.constant dense<0.000000e+00> : vector<128xf32>
    %3 = vector.multi_reduction <add>, %2, %cst_3 [0] : vector<64x128xf32> to vector<128xf32>
    %4 = vector.shape_cast %3 : vector<128xf32> to vector<1x128xf32>
    %5 = arith.mulf %2, %2 : vector<64x128xf32>
    %cst_4 = arith.constant dense<0.000000e+00> : vector<128xf32>
    %6 = vector.multi_reduction <add>, %5, %cst_4 [0] : vector<64x128xf32> to vector<128xf32>
    %7 = vector.shape_cast %6 : vector<128xf32> to vector<1x128xf32>
    %8 = vector.shape_cast %4 : vector<1x128xf32> to vector<1x1x128xf32>
    %c0_5 = arith.constant 0 : index
    %c0_6 = arith.constant 0 : index
    %c0_7 = arith.constant 0 : index
    %9 = vector.load %arg3[%c0_5, %c0_6, %c0_7] : memref<1x1x128xf32, #tpu.memory_space<vmem>>, vector<1x1x128xf32>
    tpu.vector_store %arg3[%c0_5, %c0_6, %c0_7], %8 {strides = array<i32>} : memref<1x1x128xf32, #tpu.memory_space<vmem>>, vector<1x1x128xf32>,
    %10 = vector.shape_cast %7 : vector<1x128xf32> to vector<1x1x128xf32>
    %c0_8 = arith.constant 0 : index
    %c0_9 = arith.constant 0 : index
    %c0_10 = arith.constant 0 : index
    %11 = vector.load %arg4[%c0_8, %c0_9, %c0_10] : memref<1x1x128xf32, #tpu.memory_space<vmem>>, vector<1x1x128xf32>
    tpu.vector_store %arg4[%c0_8, %c0_9, %c0_10], %10 {strides = array<i32>} : memref<1x1x128xf32, #tpu.memory_space<vmem>>, vector<1x1x128xf32>,
    return
  }
  func.func @transform_0(%arg0: i32) -> (i32, i32) {
    %c0_i32 = arith.constant 0 : i32
    %c0_i32_0 = arith.constant 0 : i32
    return %arg0, %c0_i32 : i32, i32
  }
  func.func @transform_1(%arg0: i32) -> (i32, i32) {
    %c0_i32 = arith.constant 0 : i32
    %c0_i32_0 = arith.constant 0 : i32
    %c0_i32_1 = arith.constant 0 : i32
    return %c0_i32, %c0_i32_0 : i32, i32
  }
  func.func @transform_2(%arg0: i32) -> (i32, i32, i32) {
    %c0_i32 = arith.constant 0 : i32
    %c0_i32_0 = arith.constant 0 : i32
    %c0_i32_1 = arith.constant 0 : i32
    return %arg0, %c0_i32, %c0_i32_0 : i32, i32, i32
  }
  func.func @transform_3(%arg0: i32) -> (i32, i32, i32) {
    %c0_i32 = arith.constant 0 : i32
    %c0_i32_0 = arith.constant 0 : i32
    %c0_i32_1 = arith.constant 0 : i32
    return %arg0, %c0_i32, %c0_i32_0 : i32, i32, i32
  }
}

</mosaic_0001>

<llo_original>
// kernel: tpu_custom_call.1
$region0: #{tpu_custom_call.1}
  #allocation0 [shape = 'u32[]', space=smem, size = 0x4, offset = 0x4, fixed_abs, tag = 'smem constant byte address 0x4 - core index']
  #allocation1 [shape = 'u32[144,128]{1,0:T(1,128)}', space=vmem, size = 0x12000, scoped, tag = 'internal scratch']
  %s0 = inlined_call_operand.hbm [shape: bf16[128,128], index: 0, kind: input, shape index: {}]
  %s1 = inlined_call_operand.hbm [shape: bf16[128,128], index: 1, kind: input, shape index: {}]
  %s2 = inlined_call_operand.hbm [shape: f32[2,1,128], index: 2, kind: output, shape index: {0}]
  %s3 = inlined_call_operand.hbm [shape: f32[2,1,128], index: 3, kind: output, shape index: {1}]
  %4 = xla_tuple %s2, %s3
  %s5 = sld [smem:[#allocation0]]
  $region57: #{tpu_custom_call.1} parent=0
    _
  %s7 = ssub.s32 1, %s5
  %s8 = scalar_select 0, %s7, %s5
  $region1: #{tpu_custom_call.1} parent=0
    #allocation2 [shape = 'u8[32768]{0}', space=vmem, size = 0x8000, scoped, tag = 'input window, operand 0']
    #allocation3 [shape = 's32[2]{0}', space=sflag, size = 0x8, scoped, tag = 'scoped memory for tpu_custom_call.1']
    #allocation4 [shape = 's32[2]{0}', space=sflag, size = 0x8, scoped, tag = 'scoped memory for tpu_custom_call.1']
    #allocation5 [shape = 'u8[32768]{0}', space=vmem, size = 0x8000, scoped, tag = 'input window, operand 1, single buffered']
    #allocation6 [shape = 's32[1]{0}', space=sflag, size = 0x4, scoped, tag = 'scoped memory for tpu_custom_call.1']
    #allocation7 [shape = 'u8[1024]{0}', space=vmem, size = 0x400, scoped, tag = 'output window, operand 0']
    #allocation8 [shape = 'u8[1024]{0}', space=vmem, size = 0x400, scoped, tag = 'output window, operand 1']
    #allocation9 [shape = 's32[2]{0}', space=sflag, size = 0x8, scoped, tag = 'scoped memory for tpu_custom_call.1']
    %9 = vsyncpa [#allocation3], 0
    %s10 = scalar_lea.sflag [#allocation3], 1
    %11 = vsyncpa %s10, 0
    %12 = vsyncpa [#allocation6], 0
    %13 = vsyncpa [#allocation4], 0
    %s14 = scalar_lea.sflag [#allocation4], 1
    %15 = vsyncpa %s14, 0
    %16 = vsyncpa [#allocation9], 0
    %s17 = scalar_lea.sflag [#allocation9], 1
    %18 = vsyncpa %s17, 0
    loop: start=0, step=1, limit=4
    $region2: #{tpu_custom_call.1} parent=1 // loop_pre_header
      _
    $region3: #{tpu_custom_call.1} parent=1 // loop_header
      %s20 = sphi 0, %s24
      %p21 = scmp.ge.s32.totalorder %s20, 4
      %s30 = sphi 0, %s32
      %s33 = sphi 0, %s30
      %s34 = sphi 0, %s33
      %s50 = sphi 0, %s34
      %s54 = sphi 0, %s54
      %s56 = sphi 0, %s54
      %s57 = sphi 0, %s56
      %s71 = sphi 0, %s57
      %s77 = sphi 0, %s79
      %s80 = sphi 0, %s77
      %s81 = sphi 0, %s80
      %s97 = sphi 0, %s81
      %s103 = sphi 0, %s105
      %s106 = sphi 0, %s103
      %s107 = sphi 0, %s106
      %s123 = sphi 0, %s107
    $region4: #{tpu_custom_call.1} parent=1 // loop_header_branch
      %23 = sbr.rel (%p21) target = $region8
    $region5: #{tpu_custom_call.1} parent=1 // loop_body
      %s25 = ssub.s32 %s20, 1
      %s26 = ssub.s32 %s20, 2
      %s27 = sadd.s32 %s20, 1
      %s28 = ssub.s32 %s20, %s27
      %p29 = scmp.eq.s32.totalorder %s28, 0
      %s31 = sadd.s32 %s30, 1
      %s32 = scalar_select %p29, %s30, %s31
      %p35 = pneg %p29
      %p36 = scmp.eq.s32.totalorder %s20, 1
      %p37 = por %p35, %p36
      %p38 = scmp.ne.s32.totalorder %s30, %s33
      %p39 = scmp.eq.s32.totalorder %s20, 0
      %p40 = por %p38, %p39
      %p41 = scmp.ne.s32.totalorder %s30, %s33
      %p42 = scmp.eq.s32.totalorder %s25, 1
      %p43 = por %p41, %p42
      %p44 = scmp.ne.s32.totalorder %s33, %s34
      %p45 = scmp.eq.s32.totalorder %s25, 0
      %p46 = por %p44, %p45
      %p47 = scmp.ne.s32.totalorder %s33, %s34
      %p48 = scmp.eq.s32.totalorder %s26, 1
      %p49 = por %p47, %p48
      %p51 = scmp.ne.s32.totalorder %s34, %s50
      %p52 = scmp.eq.s32.totalorder %s26, 0
      %p53 = por %p51, %p52
      %s55 = sadd.s32 %s54, 1
      %p58 = scmp.eq.s32.totalorder %s20, 1
      %p59 = scmp.ne.s32.totalorder %s54, %s56
      %p60 = scmp.eq.s32.totalorder %s20, 0
      %p61 = por %p59, %p60
      %p62 = scmp.ne.s32.totalorder %s54, %s56
      %p63 = scmp.eq.s32.totalorder %s25, 1
      %p64 = por %p62, %p63
      %p65 = scmp.ne.s32.totalorder %s56, %s57
      %p66 = scmp.eq.s32.totalorder %s25, 0
      %p67 = por %p65, %p66
      %p68 = scmp.ne.s32.totalorder %s56, %s57
      %p69 = scmp.eq.s32.totalorder %s26, 1
      %p70 = por %p68, %p69
      %p72 = scmp.ne.s32.totalorder %s57, %s71
      %p73 = scmp.eq.s32.totalorder %s26, 0
      %p74 = por %p72, %p73
      %s75 = ssub.s32 %s20, %s27
      %p76 = scmp.eq.s32.totalorder %s75, 0
      %s78 = sadd.s32 %s77, 1
      %s79 = scalar_select %p76, %s77, %s78
      %p82 = pneg %p76
      %p83 = scmp.eq.s32.totalorder %s20, 1
      %p84 = por %p82, %p83
      %p85 = scmp.ne.s32.totalorder %s77, %s80
      %p86 = scmp.eq.s32.totalorder %s20, 0
      %p87 = por %p85, %p86
      %p88 = scmp.ne.s32.totalorder %s77, %s80
      %p89 = scmp.eq.s32.totalorder %s25, 1
      %p90 = por %p88, %p89
      %p91 = scmp.ne.s32.totalorder %s80, %s81
      %p92 = scmp.eq.s32.totalorder %s25, 0
      %p93 = por %p91, %p92
      %p94 = scmp.ne.s32.totalorder %s80, %s81
      %p95 = scmp.eq.s32.totalorder %s26, 1
      %p96 = por %p94, %p95
      %p98 = scmp.ne.s32.totalorder %s81, %s97
      %p99 = scmp.eq.s32.totalorder %s26, 0
      %p100 = por %p98, %p99
      %s101 = ssub.s32 %s20, %s27
      %p102 = scmp.eq.s32.totalorder %s101, 0
      %s104 = sadd.s32 %s103, 1
      %s105 = scalar_select %p102, %s103, %s104
      %p108 = pneg %p102
      %p109 = scmp.eq.s32.totalorder %s20, 1
      %p110 = por %p108, %p109
      %p111 = scmp.ne.s32.totalorder %s103, %s106
      %p112 = scmp.eq.s32.totalorder %s20, 0
      %p113 = por %p111, %p112
      %p114 = scmp.ne.s32.totalorder %s103, %s106
      %p115 = scmp.eq.s32.totalorder %s25, 1
      %p116 = por %p114, %p115
      %p117 = scmp.ne.s32.totalorder %s106, %s107
      %p118 = scmp.eq.s32.totalorder %s25, 0
      %p119 = por %p117, %p118
      %p120 = scmp.ne.s32.totalorder %s106, %s107
      %p121 = scmp.eq.s32.totalorder %s26, 1
      %p122 = por %p120, %p121
      %p124 = scmp.ne.s32.totalorder %s107, %s123
      %p125 = scmp.eq.s32.totalorder %s26, 0
      %p126 = por %p124, %p125
      %p127 = scmp.le.s32.totalorder 1, %s20
      %p128 = scmp.lt.s32.totalorder %s20, 3
      %p129 = pnand %p127, %p128
      %p130 = pneg %p129
      // Predicated region
      $region9: #{tpu_custom_call.1} parent=5 // pred_check
        _
      $region10: #{tpu_custom_call.1} parent=5 // pred_check_branch
        %132 = sbr.rel (%p129) target = $region12
      $region11: #{tpu_custom_call.1} parent=5 // pred_region
        %s133 = ssub.s32 %s20, 1
        // Predicated region
        $region13: #{tpu_custom_call.1} parent=11 // pred_check
          %p134 = pneg %p67
        $region14: #{tpu_custom_call.1} parent=11 // pred_check_branch
          %136 = sbr.rel (%p134) target = $region16
        $region15: #{tpu_custom_call.1} parent=11 // pred_region
          %s138 = ssub.s32 1024, 1024
          %139 = vsyncadd [#allocation6], %s138
          %s140 = sshll.u32 [#allocation5], 4
          %s141 = int_to_ptr.vmem [resolvable:$true] %s140
          %146 = dma.hbm_to_vmem [thread:$0]  %s1, 1024, %s141, [#allocation6], 64, 64, 4
        $region16: #{tpu_custom_call.1} parent=11 // pred_fallthru
          _
      $region12: #{tpu_custom_call.1} parent=5 // pred_fallthru
        _
      %p147 = scmp.lt.s32.totalorder %s20, 2
      // Predicated region
      $region17: #{tpu_custom_call.1} parent=5 // pred_check
        %p148 = pneg %p147
      $region18: #{tpu_custom_call.1} parent=5 // pred_check_branch
        %150 = sbr.rel (%p148) target = $region20
      $region19: #{tpu_custom_call.1} parent=5 // pred_region
        // Predicated region
        $region21: #{tpu_custom_call.1} parent=19 // pred_check
          %p151 = pneg %p40
        $region22: #{tpu_custom_call.1} parent=19 // pred_check_branch
          %153 = sbr.rel (%p151) target = $region24
        $region23: #{tpu_custom_call.1} parent=19 // pred_region
          %s154 = sand.u32 %s30, 1
          %s155 = scalar_lea.sflag [#allocation3], %s154
          %s156 = sand.u32 %s30, 1
          %s157 = smul.addr %s156, 32
          %s158 = scalar_lea.vmem [#allocation2], %s157
          %s159 = smul.u32 8, %s20
          %s161 = ssub.s32 512, 512
          %162 = vsyncadd %s155, %s161
          %s163 = smul.addr %s159, 64
          %s164 = scalar_lea.hbm %s0, %s163
          %s165 = sshll.u32 %s158, 4
          %s166 = int_to_ptr.vmem [resolvable:$true] %s165
          %171 = dma.hbm_to_vmem [thread:$0]  %s164, 512, %s166, %s155, 64, 64, 4
        $region24: #{tpu_custom_call.1} parent=19 // pred_fallthru
          _
      $region20: #{tpu_custom_call.1} parent=5 // pred_fallthru
        _
      %p172 = scmp.le.s32.totalorder 1, %s20
      %p173 = scmp.lt.s32.totalorder %s20, 3
      %p174 = pnand %p172, %p173
      %p175 = pneg %p174
      // Predicated region
      $region25: #{tpu_custom_call.1} parent=5 // pred_check
        _
      $region26: #{tpu_custom_call.1} parent=5 // pred_check_branch
        %177 = sbr.rel (%p174) target = $region28
      $region27: #{tpu_custom_call.1} parent=5 // pred_region
        %s178 = ssub.s32 %s20, 1
        %s179 = sand.u32 %s33, 1
        %s180 = scalar_lea.sflag [#allocation3], %s179
        %s181 = sand.u32 %s33, 1
        %s182 = smul.addr %s181, 32
        %s183 = scalar_lea.vmem [#allocation2], %s182
        // Predicated region
        $region29: #{tpu_custom_call.1} parent=27 // pred_check
          %p184 = pneg %p46
        $region30: #{tpu_custom_call.1} parent=27 // pred_check_branch
          %186 = sbr.rel (%p184) target = $region32
        $region31: #{tpu_custom_call.1} parent=27 // pred_region
          %187 = dma.done %s180, 512
        $region32: #{tpu_custom_call.1} parent=27 // pred_fallthru
          _
        // Predicated region
        $region33: #{tpu_custom_call.1} parent=27 // pred_check
          %p188 = pneg %p67
        $region34: #{tpu_custom_call.1} parent=27 // pred_check_branch
          %190 = sbr.rel (%p188) target = $region36
        $region35: #{tpu_custom_call.1} parent=27 // pred_region
          %191 = dma.done [#allocation6], 1024
        $region36: #{tpu_custom_call.1} parent=27 // pred_fallthru
          _
        %s192 = sand.u32 %s33, 1
        %s193 = scalar_lea.sflag [#allocation3], %s192
        %s194 = sand.u32 %s33, 1
        %s195 = smul.addr %s194, 32
        %s196 = scalar_lea.vmem [#allocation2], %s195
        %p197 = pneg %p46
        %p198 = pneg %p43
        %p199 = pneg %p67
        %p200 = pneg %p64
        %p201 = pneg %p93
        %p202 = pneg %p90
        %s203 = sand.u32 %s80, 1
        %s204 = scalar_lea.sflag [#allocation4], %s203
        %s205 = sand.u32 %s80, 1
        %s206 = scalar_lea.vmem [#allocation7], %s205
        %p207 = pneg %p119
        %p208 = pneg %p116
        %s209 = sand.u32 %s106, 1
        %s210 = scalar_lea.sflag [#allocation9], %s209
        %s211 = sand.u32 %s106, 1
        %s212 = scalar_lea.vmem [#allocation8], %s211
        %s213 = smul.u32 8, %s25
        %v215 = vld [vmem:[%s183] sm:$0xf]
        %v216 = vld [vmem:[%s183 + $0x4] sm:$0xf]
        %v217 = vld [vmem:[%s183 + $0x8] sm:$0xf]
        %v218 = vld [vmem:[%s183 + $0xc] sm:$0xf]
        %v219 = vld [vmem:[%s183 + $0x10] sm:$0xf]
        %v220 = vld [vmem:[%s183 + $0x14] sm:$0xf]
        %v221 = vld [vmem:[%s183 + $0x18] sm:$0xf]
        %v222 = vld [vmem:[%s183 + $0x1c] sm:$0xf]
        %v223 = vld [vmem:[#allocation5] sm:$0xf]
        %v224 = vld [vmem:[#allocation5 + $0x4] sm:$0xf]
        %v225 = vld [vmem:[#allocation5 + $0x8] sm:$0xf]
        %v226 = vld [vmem:[#allocation5 + $0xc] sm:$0xf]
        %v227 = vld [vmem:[#allocation5 + $0x10] sm:$0xf]
        %v228 = vld [vmem:[#allocation5 + $0x14] sm:$0xf]
        %v229 = vld [vmem:[#allocation5 + $0x18] sm:$0xf]
        %v230 = vld [vmem:[#allocation5 + $0x1c] sm:$0xf]
        %v231 = vld [vmem:[#allocation5 + $0x20] sm:$0xf]
        %v232 = vld [vmem:[#allocation5 + $0x24] sm:$0xf]
        %v233 = vld [vmem:[#allocation5 + $0x28] sm:$0xf]
        %v234 = vld [vmem:[#allocation5 + $0x2c] sm:$0xf]
        %v235 = vld [vmem:[#allocation5 + $0x30] sm:$0xf]
        %v236 = vld [vmem:[#allocation5 + $0x34] sm:$0xf]
        %v237 = vld [vmem:[#allocation5 + $0x38] sm:$0xf]
        %v238 = vld [vmem:[#allocation5 + $0x3c] sm:$0xf]
        %v247 = vunpack.c.l.b16 %v215
        %v248 = vunpack.c.l.b16 %v216
        %v249 = vunpack.c.l.b16 %v217
        %v250 = vunpack.c.l.b16 %v218
        %v251 = vunpack.c.l.b16 %v219
        %v252 = vunpack.c.l.b16 %v220
        %v253 = vunpack.c.l.b16 %v221
        %v254 = vunpack.c.l.b16 %v222
        %v255 = vpack.c.b16 %v248, %v247
        %v256 = vpack.c.b16 %v250, %v249
        %v257 = vpack.c.b16 %v252, %v251
        %v258 = vpack.c.b16 %v254, %v253
        %v279 = vunpack.c.l.b16 %v223
        %v280 = vunpack.c.l.b16 %v224
        %v281 = vunpack.c.l.b16 %v225
        %v282 = vunpack.c.l.b16 %v226
        %v283 = vunpack.c.l.b16 %v227
        %v284 = vunpack.c.l.b16 %v228
        %v285 = vunpack.c.l.b16 %v229
        %v286 = vunpack.c.l.b16 %v230
        %v287 = vunpack.c.l.b16 %v231
        %v288 = vunpack.c.l.b16 %v232
        %v289 = vunpack.c.l.b16 %v233
        %v290 = vunpack.c.l.b16 %v234
        %v291 = vunpack.c.l.b16 %v235
        %v292 = vunpack.c.l.b16 %v236
        %v293 = vunpack.c.l.b16 %v237
        %v294 = vunpack.c.l.b16 %v238
        %v295 = vpack.c.b16 %v280, %v279
        %v296 = vpack.c.b16 %v282, %v281
        %v297 = vpack.c.b16 %v284, %v283
        %v298 = vpack.c.b16 %v286, %v285
        %v299 = vpack.c.b16 %v288, %v287
        %v300 = vpack.c.b16 %v290, %v289
        %v301 = vpack.c.b16 %v292, %v291
        %v302 = vpack.c.b16 %v294, %v293
        %311 = vmatprep.subr.bf16.mxu0 0
        %312 = vmatpush1.bf16.msra.mxu0 %v302
        %313 = vmatprep.subr.bf16.mxu0 0
        %314 = vmatpush1.bf16.msra.mxu0 %v301
        %315 = vmatprep.subr.bf16.mxu0 0
        %316 = vmatpush1.bf16.msra.mxu0 %v300
        %317 = vmatprep.subr.bf16.mxu0 0
        %318 = vmatpush1.bf16.msra.mxu0 %v299
        %319 = vmatprep.subr.bf16.mxu0 0
        %320 = vmatpush1.bf16.msra.mxu0 %v298
        %321 = vmatprep.subr.bf16.mxu0 0
        %322 = vmatpush1.bf16.msra.mxu0 %v297
        %323 = vmatprep.subr.bf16.mxu0 0
        %324 = vmatpush1.bf16.msra.mxu0 %v296
        %325 = vmatprep.subr.bf16.mxu0 0
        %326 = vmatpush1.bf16.msra.mxu0 %v295
        %327 = vmatprep.subr.bf16.mxu0 0
        %328 = vmatpush2.bf16.msra.mxu0 0
        %329 = vmatprep.subr.bf16.mxu0 0
        %330 = vmatpush2.bf16.msra.mxu0 0
        %331 = vmatprep.subr.bf16.mxu0 0
        %332 = vmatpush2.bf16.msra.mxu0 0
        %333 = vmatprep.subr.bf16.mxu0 0
        %334 = vmatpush2.bf16.msra.mxu0 0
        %335 = vmatprep.subr.bf16.mxu0 0
        %336 = vmatpush2.bf16.msra.mxu0 0
        %337 = vmatprep.subr.bf16.mxu0 0
        %338 = vmatpush2.bf16.msra.mxu0 0
        %339 = vmatprep.subr.bf16.mxu0 0
        %340 = vmatpush2.bf16.msra.mxu0 0
        %341 = vmatprep.subr.bf16.mxu0 0
        %342 = vmatpush2.bf16.msra.mxu0 0
        %343 = vmatprep.mubr.bf16.mxu0 0
        %344 = vmatmul.mubr.bf16.gmra.mxu0 %v255
        %v345 = vpop.f32.mrf.mxu0
        %v346 = vadd.f32 0.0, %v345
        %v347 = vpop.f32.mrf.mxu0
        %v348 = vpop.f32.mrf.mxu0
        %v349 = vadd.f32 0.0, %v348
        %v350 = vpop.f32.mrf.mxu0
        %351 = vmatprep.mubr.bf16.mxu0 0
        %352 = vmatmul.mubr.bf16.gmra.mxu0 %v256
        %v353 = vpop.f32.mrf.mxu0
        %v354 = vadd.f32 0.0, %v353
        %v355 = vpop.f32.mrf.mxu0
        %v356 = vpop.f32.mrf.mxu0
        %v357 = vadd.f32 0.0, %v356
        %v358 = vpop.f32.mrf.mxu0
        %359 = vmatprep.mubr.bf16.mxu0 0
        %360 = vmatmul.mubr.bf16.gmra.mxu0 %v257
        %v361 = vpop.f32.mrf.mxu0
        %v362 = vadd.f32 0.0, %v361
        %v363 = vpop.f32.mrf.mxu0
        %v364 = vpop.f32.mrf.mxu0
        %v365 = vadd.f32 0.0, %v364
        %v366 = vpop.f32.mrf.mxu0
        %367 = vmatprep.mubr.bf16.mxu0 0
        %368 = vmatmul.mubr.bf16.gmra.mxu0 %v258
        %v369 = vpop.f32.mrf.mxu0
        %v370 = vadd.f32 0.0, %v369
        %v371 = vpop.f32.mrf.mxu0
        %v372 = vpop.f32.mrf.mxu0
        %v373 = vadd.f32 0.0, %v372
        %v374 = vpop.f32.mrf.mxu0
        %375 = vdwg.mxu0
        %v376 = vadd.f32 %v346, %v349
        %v377 = vadd.f32 %v376, %v354
        %v378 = vadd.f32 %v377, %v357
        %v379 = vadd.f32 %v378, %v362
        %v380 = vadd.f32 %v379, %v365
        %v381 = vadd.f32 %v380, %v370
        %v382 = vadd.f32 %v381, %v373
        %v383 = vrot.slane %v382, 4
        %v384 = vadd.f32 %v382, %v383
        %v385 = vrot.slane %v384, 2
        %v386 = vadd.f32 %v384, %v385
        %v387 = vrot.slane %v386, 1
        %v388 = vadd.f32 %v386, %v387
        %v389 = vmul.f32 %v346, %v346
        %v390 = vmul.f32 %v349, %v349
        %v391 = vmul.f32 %v354, %v354
        %v392 = vmul.f32 %v357, %v357
        %v393 = vmul.f32 %v362, %v362
        %v394 = vmul.f32 %v365, %v365
        %v395 = vmul.f32 %v370, %v370
        %v396 = vmul.f32 %v373, %v373
        %v397 = vadd.f32 %v389, %v390
        %v398 = vadd.f32 %v397, %v391
        %v399 = vadd.f32 %v398, %v392
        %v400 = vadd.f32 %v399, %v393
        %v401 = vadd.f32 %v400, %v394
        %v402 = vadd.f32 %v401, %v395
        %v403 = vadd.f32 %v402, %v396
        %v404 = vrot.slane %v403, 4
        %v405 = vadd.f32 %v403, %v404
        %v406 = vrot.slane %v405, 2
        %v407 = vadd.f32 %v405, %v406
        %v408 = vrot.slane %v407, 1
        %v409 = vadd.f32 %v407, %v408
        %410 = vst [vmem:[%s206] sm:$0x1] %v388
        %411 = vst [vmem:[%s212] sm:$0x1] %v409
        %s412 = sand.u32 %s80, 1
        %s413 = scalar_lea.sflag [#allocation4], %s412
        %s414 = sand.u32 %s80, 1
        %s415 = scalar_lea.vmem [#allocation7], %s414
        %s416 = sand.u32 %s106, 1
        %s417 = scalar_lea.sflag [#allocation9], %s416
        %s418 = sand.u32 %s106, 1
        %s419 = scalar_lea.vmem [#allocation8], %s418
        // Predicated region
        $region37: #{tpu_custom_call.1} parent=27 // pred_check
          %p420 = pneg %p90
        $region38: #{tpu_custom_call.1} parent=27 // pred_check_branch
          %422 = sbr.rel (%p420) target = $region40
        $region39: #{tpu_custom_call.1} parent=27 // pred_region
          %s424 = ssub.s32 16, 16
          %425 = vsyncadd %s413, %s424
          %s426 = smul.addr %s25, 16
          %s427 = scalar_lea.hbm %s2, %s426
          %s429 = sshll.u32 %s415, 4
          %s430 = int_to_ptr.vmem [resolvable:$true] %s429
          %432 = dma.vmem_to_hbm [thread:$0]  %s430, 16, %s427, %s413
        $region40: #{tpu_custom_call.1} parent=27 // pred_fallthru
          _
        // Predicated region
        $region41: #{tpu_custom_call.1} parent=27 // pred_check
          %p433 = pneg %p116
        $region42: #{tpu_custom_call.1} parent=27 // pred_check_branch
          %435 = sbr.rel (%p433) target = $region44
        $region43: #{tpu_custom_call.1} parent=27 // pred_region
          %s437 = ssub.s32 16, 16
          %438 = vsyncadd %s417, %s437
          %s439 = smul.addr %s25, 16
          %s440 = scalar_lea.hbm %s3, %s439
          %s442 = sshll.u32 %s419, 4
          %s443 = int_to_ptr.vmem [resolvable:$true] %s442
          %445 = dma.vmem_to_hbm [thread:$0]  %s443, 16, %s440, %s417
        $region44: #{tpu_custom_call.1} parent=27 // pred_fallthru
          _
      $region28: #{tpu_custom_call.1} parent=5 // pred_fallthru
        _
      %p446 = scmp.le.s32.totalorder 2, %s20
      // Predicated region
      $region45: #{tpu_custom_call.1} parent=5 // pred_check
        %p447 = pneg %p446
      $region46: #{tpu_custom_call.1} parent=5 // pred_check_branch
        %449 = sbr.rel (%p447) target = $region48
      $region47: #{tpu_custom_call.1} parent=5 // pred_region
        %s450 = ssub.s32 %s20, 2
        // Predicated region
        $region49: #{tpu_custom_call.1} parent=47 // pred_check
          %p451 = pneg %p96
        $region50: #{tpu_custom_call.1} parent=47 // pred_check_branch
          %453 = sbr.rel (%p451) target = $region52
        $region51: #{tpu_custom_call.1} parent=47 // pred_region
          %s454 = sand.u32 %s81, 1
          %s455 = scalar_lea.sflag [#allocation4], %s454
          %s456 = sand.u32 %s81, 1
          %s457 = scalar_lea.vmem [#allocation7], %s456
          %458 = dma.done %s455, 16
        $region52: #{tpu_custom_call.1} parent=47 // pred_fallthru
          _
        // Predicated region
        $region53: #{tpu_custom_call.1} parent=47 // pred_check
          %p459 = pneg %p122
        $region54: #{tpu_custom_call.1} parent=47 // pred_check_branch
          %461 = sbr.rel (%p459) target = $region56
        $region55: #{tpu_custom_call.1} parent=47 // pred_region
          %s462 = sand.u32 %s107, 1
          %s463 = scalar_lea.sflag [#allocation9], %s462
          %s464 = sand.u32 %s107, 1
          %s465 = scalar_lea.vmem [#allocation8], %s464
          %466 = dma.done %s463, 16
        $region56: #{tpu_custom_call.1} parent=47 // pred_fallthru
          _
      $region48: #{tpu_custom_call.1} parent=5 // pred_fallthru
        _
    $region6: #{tpu_custom_call.1} parent=1 // loop_footer
      %s24 = sadd.s32 1, %s20
    $region7: #{tpu_custom_call.1} parent=1 // loop_footer_branch
      %19 = sbr.rel target = $region3
    $region8: #{tpu_custom_call.1} parent=1 // loop_exit
      _
    %467 = vsyncpa [#allocation3], 1
    %s468 = scalar_lea.sflag [#allocation3], 1
    %469 = vsyncpa %s468, 1
    %470 = vsyncpa [#allocation6], 1
    %471 = vsyncpa [#allocation4], 1
    %s472 = scalar_lea.sflag [#allocation4], 1
    %473 = vsyncpa %s472, 1
    %474 = vsyncpa [#allocation9], 1
    %s475 = scalar_lea.sflag [#allocation9], 1
    %476 = vsyncpa %s475, 1

</llo_original>
